<compile_context>
chip_gen: v6e
topology: v6e:2x2x1
jax: 0.10.0
libtpu: 0.0.40
codegen_flags: <defaults>
</compile_context>

<pallas_src>
import functools

import jax
import jax.numpy as jnp
from jax.experimental import pallas as pl
from jax.experimental.pallas import tpu as pltpu


# --------------------------------------------------------------------------- kernels
def _squeeze_kernel(x_ref, sum_ref, *, s_size, s_tile, n_inner, need_mask):
    """Accumulate per-row spatial sums (f32) over lane tiles.

    Grid: (row tiles, P parallel spatial splits, inner spatial tiles [reduction, last]).
    x_ref:   (R_TILE, S_TILE) tile of x.
    sum_ref: (1, R_TILE, 1) f32 accumulator block, resident across the innermost axis.
    """
    @pl.when(pl.program_id(2) == 0)
    def _():
        sum_ref[...] = jnp.zeros_like(sum_ref)

    x = x_ref[...].astype(jnp.float32)
    if need_mask:
        # Global (unclamped) lane-tile index. Columns >= s_size — the ragged tail of the
        # last tile, or an entire duplicated (clamped) tile — contribute zero.
        t = pl.program_id(1) * n_inner + pl.program_id(2)
        col = t * s_tile + jax.lax.broadcasted_iota(jnp.int32, x.shape, 1)
        x = jnp.where(col < s_size, x, 0.0)
    sum_ref[...] += jnp.sum(x, axis=-1, keepdims=True)[None]


def _scale_kernel(g_ref, x_ref, o_ref):
    """y = g * x, gate broadcast along lanes, in x's native dtype."""
    o_ref[...] = x_ref[...] * g_ref[...].astype(o_ref.dtype)


# --------------------------------------------------------------------------- tiling
def _round_up(a, b):
    return ((a + b - 1) // b) * b


def _tpu_caps():
    """(vmem_limit_bytes, per-pass working-set budget, multi_core) — generation aware."""
    cap = 64 * 2**20                      # conservative default (v7x per-TensorCore VMEM)
    try:
        cap = int(pltpu.get_tpu_info().vmem_capacity_bytes) or cap
    except Exception:                     # info unavailable -> keep conservative default
        pass
    multi_core = cap <= 64 * 2**20        # v7x: 64 MiB/TC & 2 TCs; v5e/v6e: 128 MiB & 1 TC
    vmem_limit = int(min(cap * 3 // 4, 96 * 2**20))   # 48 MiB on v7x, 96 MiB on v5e/v6e
    budget = int(min(32 * 2**20, cap // 2))           # live tiles per pass fit this
    return vmem_limit, budget, multi_core


def _choose_row_tile(R, p_sub, itemsize, budget, want_split):
    """Rows per block: multiple of the dtype sublane pack, or the full row extent."""
    # Cap rows so the 4-buffer scale pass can still use >= 512 lanes per tile.
    r_cap = max(p_sub, (budget // (4 * 512 * itemsize)) // p_sub * p_sub)
    if want_split and R > p_sub:
        half = _round_up((R + 1) // 2, p_sub)   # >= 2 row tiles for megacore sharding
        return int(min(r_cap, half))
    if R <= r_cap:
        return int(R)                           # full rows in one block (always legal)
    return int(r_cap)


def _choose_s_tile(S, r_tile, itemsize, budget, n_bufs):
    """Lane tile: multiple of 128 (or full S), sized so n_bufs live tiles fit budget."""
    if S <= 128:
        return int(S)                           # single full-extent lane block
    s_tile = (budget // (n_bufs * r_tile * itemsize)) // 128 * 128
    s_tile = max(128, min(int(s_tile), (S // 128) * 128))
    return int(s_tile)


# --------------------------------------------------------------------------- wrapper
def channel_gate_3d(x, w1, b1, w2, b2, *, tile_budget_bytes=None):
    """x: (N, C, D, H, W); w1: (Cr, C); b1: (Cr,); w2: (C, Cr); b2: (C,)."""
    N, C, D, H, W = x.shape
    S = D * H * W
    R = N * C
    itemsize = jnp.dtype(x.dtype).itemsize
    p_sub = max(8, 32 // itemsize)              # sublane pack: 8 f32 / 16 bf16 / 32 int8

    vmem_limit, budget, multi_core = _tpu_caps()
    if tile_budget_bytes is not None:
        budget = int(tile_budget_bytes)

    r_tile = _choose_row_tile(R, p_sub, itemsize, budget, want_split=multi_core)
    n_rtiles = pl.cdiv(R, r_tile)

    # Per-pass lane tiles: squeeze has 2 large live buffers, scale has 4.
    s_tile_sq = _choose_s_tile(S, r_tile, itemsize, budget, n_bufs=2)
    n_stiles_sq = pl.cdiv(S, s_tile_sq)
    s_tile_sc = _choose_s_tile(S, r_tile, itemsize, budget, n_bufs=4)
    n_stiles_sc = pl.cdiv(S, s_tile_sc)

    # On 2-TC chips the squeeze reduction axis is "arbitrary"; if the row axis alone
    # cannot feed both cores, add a parallel spatial split producing P partial sums.
    P = 2 if (multi_core and n_rtiles == 1 and n_stiles_sq >= 2) else 1
    n_inner = pl.cdiv(n_stiles_sq, P)
    need_mask = (S % s_tile_sq != 0) or (P * n_inner != n_stiles_sq)

    if P * n_inner == n_stiles_sq:
        x_sq_index = lambda r, p, s: (r, p * n_inner + s)
    else:  # last (p, s) step would run off the end: clamp (its contribution is masked)
        x_sq_index = lambda r, p, s: (r, jnp.minimum(p * n_inner + s, n_stiles_sq - 1))

    x2 = x.reshape(R, S)

    # ---- pass 1: squeeze (tiled global sum over spatial, no padding copies) ---------
    partials = pl.pallas_call(
        functools.partial(_squeeze_kernel, s_size=S, s_tile=s_tile_sq,
                          n_inner=n_inner, need_mask=need_mask),
        out_shape=jax.ShapeDtypeStruct((P, R, 1), jnp.float32),
        grid_spec=pltpu.PrefetchScalarGridSpec(
            num_scalar_prefetch=0,
            grid=(n_rtiles, P, n_inner),
            in_specs=[pl.BlockSpec((r_tile, s_tile_sq), x_sq_index)],
            out_specs=pl.BlockSpec((1, r_tile, 1), lambda r, p, s: (p, r, 0)),
        ),
        compiler_params=pltpu.CompilerParams(
            dimension_semantics=("parallel", "parallel", "arbitrary"),
            vmem_limit_bytes=vmem_limit),
    )(x2)

    # ---- excite: tiny MLP hoisted out of the kernel (plain XLA, off the MXU path) ---
    sums = jnp.sum(partials[:, :, 0], axis=0).reshape(N, C)       # (N, C) f32
    means = sums * (1.0 / float(S))
    f32 = jnp.float32
    h = jax.nn.relu(means @ w1.astype(f32).T + b1.astype(f32))    # (N, Cr)
    g = jax.nn.sigmoid(h @ w2.astype(f32).T + b2.astype(f32))     # (N, C)
    g = g.reshape(R, 1)                                           # per-row gate

    # ---- pass 2: scale (tiled broadcast multiply, ragged tail via masked stores) ----
    out2 = pl.pallas_call(
        _scale_kernel,
        out_shape=jax.ShapeDtypeStruct((R, S), x.dtype),
        grid_spec=pltpu.PrefetchScalarGridSpec(
            num_scalar_prefetch=0,
            grid=(n_rtiles, n_stiles_sc),
            in_specs=[
                pl.BlockSpec((r_tile, 1), lambda r, s: (r, 0)),          # gate
                pl.BlockSpec((r_tile, s_tile_sc), lambda r, s: (r, s)),  # x
            ],
            out_specs=pl.BlockSpec((r_tile, s_tile_sc), lambda r, s: (r, s)),
        ),
        compiler_params=pltpu.CompilerParams(
            dimension_semantics=("parallel", "parallel"),
            vmem_limit_bytes=vmem_limit),
    )(g, x2)

    return out2.reshape(N, C, D, H, W)


# --------------------------------------------------------------------------- reference
def reference_channel_gate_3d(x, w1, b1, w2, b2):
    """Pure-JAX reference matching the PyTorch forward."""
    s = jnp.mean(x, axis=(2, 3, 4))                          # (N, C)
    h = jax.nn.relu(s @ w1.T + b1)                           # (N, Cr)
    g = jax.nn.sigmoid(h @ w2.T + b2)                        # (N, C)
    return g[:, :, None, None, None] * x


def _make_inputs(key, N, C, Cr, D, H, W):
    kx, k1, k2, k3, k4 = jax.random.split(key, 5)
    x = jax.random.normal(kx, (N, C, D, H, W), dtype=jnp.float32)
    # Conv3d(C, Cr, 1) weight is (Cr, C, 1, 1, 1) -> (Cr, C); bias (Cr,)
    w1 = jax.random.normal(k1, (Cr, C), dtype=jnp.float32) * 0.1
    b1 = jax.random.normal(k2, (Cr,), dtype=jnp.float32) * 0.1
    # Conv3d(Cr, C, 1) weight -> (C, Cr); bias (C,)
    w2 = jax.random.normal(k3, (C, Cr), dtype=jnp.float32) * 0.1
    b2 = jax.random.normal(k4, (C,), dtype=jnp.float32) * 0.1
    return x, w1, b1, w2, b2


if __name__ == "__main__":
    key = jax.random.PRNGKey(0)
    k_a, k_b = jax.random.split(key, 2)

    # Primary run: N=2, C=8, reduction=2, D=4, H=8, W=8 (S = 256, lane aligned).
    N, C, reduction, D, H, W = 2, 8, 2, 4, 8, 8
    x, w1, b1, w2, b2 = _make_inputs(k_a, N, C, C // reduction, D, H, W)
    y = jax.block_until_ready(channel_gate_3d(x, w1, b1, w2, b2))
    y_ref = reference_channel_gate_3d(x, w1, b1, w2, b2)
    assert y.shape == (N, C, D, H, W)
    assert jnp.allclose(y, y_ref, atol=1e-5, rtol=1e-5), "mismatch vs reference (aligned)"

    # Secondary check: spatial extent NOT a multiple of 128 exercises the in-kernel
    # ragged-tail mask (squeeze) and masked partial-block stores (scale) — no pad/slice.
    N2, C2, D2, H2, W2 = 1, 8, 3, 6, 12                      # S = 216
    x2, w1b, b1b, w2b, b2b = _make_inputs(k_b, N2, C2, C2 // reduction, D2, H2, W2)
    y2 = jax.block_until_ready(channel_gate_3d(x2, w1b, b1b, w2b, b2b))
    y2_ref = reference_channel_gate_3d(x2, w1b, b1b, w2b, b2b)
    assert y2.shape == (N2, C2, D2, H2, W2)
    assert jnp.allclose(y2, y2_ref, atol=1e-5, rtol=1e-5), "mismatch vs reference (ragged)"

    print("KERNEL_OK")
</pallas_src>

<mosaic_0001>
module attributes {stable_mosaic.version = 11 : i64} {
  func.func @_squeeze_kernel(%arg0: i32, %arg1: i32, %arg2: i32, %arg3: memref<8x256xf32, #tpu.memory_space<vmem>>, %arg4: memref<1x8x1xf32, #tpu.memory_space<vmem>>) attributes {dimension_semantics = [#tpu.dimension_semantics<parallel>, #tpu.dimension_semantics<parallel>, #tpu.dimension_semantics<arbitrary>], iteration_bounds = array<i64: 2, 1, 1>, scalar_prefetch = 0 : i64, scratch_operands = 0 : i64, tpu.core_type = #tpu.core_type<tc>, window_params = [{transform_indices = @transform_0, window_bounds = array<i64: 8, 256>}, {transform_indices = @transform_1, window_bounds = array<i64: 1, 8, 1>}]} {
    %c0_i32 = arith.constant 0 : i32
    %0 = arith.cmpi eq, %arg2, %c0_i32 : i32
    %1 = arith.extui %0 : i1 to i32
    %c0_i32_0 = arith.constant 0 : i32
    %2 = arith.cmpi ne, %1, %c0_i32_0 : i32
    scf.if %2 {
      %cst_8 = arith.constant 0.000000e+00 : f32
      %10 = vector.broadcast %cst_8 : f32 to vector<1x8x1xf32>
      %c0_9 = arith.constant 0 : index
      %c0_10 = arith.constant 0 : index
      %c0_11 = arith.constant 0 : index
      %11 = vector.load %arg4[%c0_9, %c0_10, %c0_11] : memref<1x8x1xf32, #tpu.memory_space<vmem>>, vector<1x8x1xf32>
      tpu.vector_store %arg4[%c0_9, %c0_10, %c0_11], %10 {strides = array<i32>} : memref<1x8x1xf32, #tpu.memory_space<vmem>>, vector<1x8x1xf32>,
    } else {
    }
    %c0 = arith.constant 0 : index
    %c0_1 = arith.constant 0 : index
    %3 = vector.load %arg3[%c0, %c0_1] : memref<8x256xf32, #tpu.memory_space<vmem>>, vector<8x256xf32>
    %c0_2 = arith.constant 0 : index
    %c0_3 = arith.constant 0 : index
    %c0_4 = arith.constant 0 : index
    %4 = vector.load %arg4[%c0_2, %c0_3, %c0_4] : memref<1x8x1xf32, #tpu.memory_space<vmem>>, vector<1x8x1xf32>
    %cst = arith.constant dense<0.000000e+00> : vector<8xf32>
    %5 = vector.multi_reduction <add>, %3, %cst [1] : vector<8x256xf32> to vector<8xf32>
    %6 = vector.shape_cast %5 : vector<8xf32> to vector<8x1xf32>
    %7 = vector.shape_cast %6 : vector<8x1xf32> to vector<1x8x1xf32>
    %8 = arith.addf %4, %7 : vector<1x8x1xf32>
    %c0_5 = arith.constant 0 : index
    %c0_6 = arith.constant 0 : index
    %c0_7 = arith.constant 0 : index
    %9 = vector.load %arg4[%c0_5, %c0_6, %c0_7] : memref<1x8x1xf32, #tpu.memory_space<vmem>>, vector<1x8x1xf32>
    tpu.vector_store %arg4[%c0_5, %c0_6, %c0_7], %8 {strides = array<i32>} : memref<1x8x1xf32, #tpu.memory_space<vmem>>, vector<1x8x1xf32>,
    return
  }
  func.func @transform_0(%arg0: i32, %arg1: i32, %arg2: i32) -> (i32, i32) {
    %c1_i32 = arith.constant 1 : i32
    %0 = arith.muli %arg1, %c1_i32 : i32
    %1 = arith.addi %0, %arg2 : i32
    %c0_i32 = arith.constant 0 : i32
    return %arg0, %1 : i32, i32
  }
  func.func @transform_1(%arg0: i32, %arg1: i32, %arg2: i32) -> (i32, i32, i32) {
    %c0_i32 = arith.constant 0 : i32
    %c0_i32_0 = arith.constant 0 : i32
    return %arg1, %arg0, %c0_i32 : i32, i32, i32
  }
}

</mosaic_0001>

<llo_original>
// kernel: tpu_custom_call.1
$region0: #{tpu_custom_call.1}
  #allocation0 [shape = 'u32[]', space=smem, size = 0x4, offset = 0x4, fixed_abs, tag = 'smem constant byte address 0x4 - core index']
  #allocation1 [shape = 'u32[144,128]{1,0:T(1,128)}', space=vmem, size = 0x12000, scoped, tag = 'internal scratch']
  %s0 = inlined_call_operand.hbm [shape: f32[16,256], index: 0, kind: input, shape index: {}]
  %s1 = inlined_call_operand.vmem [shape: f32[1,16,1], index: 1, kind: output, shape index: {}]
  %s2 = sld [smem:[#allocation0]]
  $region45: #{tpu_custom_call.1} parent=0
    _
  %s4 = ssub.s32 1, %s2
  %s5 = scalar_select 0, %s4, %s2
  $region1: #{tpu_custom_call.1} parent=0
    #allocation2 [shape = 'u8[16384]{0}', space=vmem, size = 0x4000, scoped, tag = 'input window, operand 0']
    #allocation3 [shape = 's32[2]{0}', space=sflag, size = 0x8, scoped, tag = 'scoped memory for tpu_custom_call.1']
    %6 = vsyncpa [#allocation3], 0
    %s7 = scalar_lea.sflag [#allocation3], 1
    %8 = vsyncpa %s7, 0
    loop: start=0, step=1, limit=4
    $region2: #{tpu_custom_call.1} parent=1 // loop_pre_header
      _
    $region3: #{tpu_custom_call.1} parent=1 // loop_header
      %s10 = sphi 0, %s14
      %p11 = scmp.ge.s32.totalorder %s10, 4
      %s17 = sphi 0, %s36
      %s18 = sphi 0, %s32
      %s19 = sphi 0, %s28
      %s20 = sphi 0, %s17
      %s21 = sphi 0, %s18
      %s22 = sphi 0, %s19
      %s23 = sphi 0, %s20
      %s24 = sphi 0, %s21
      %s25 = sphi 0, %s22
      %s43 = sphi 0, %s45
      %s46 = sphi 0, %s43
      %s47 = sphi 0, %s46
      %s63 = sphi 0, %s47
      %s71 = sphi 0, %s73
      %s74 = sphi 0, %s71
      %s75 = sphi 0, %s74
      %s91 = sphi 0, %s75
    $region4: #{tpu_custom_call.1} parent=1 // loop_header_branch
      %13 = sbr.rel (%p11) target = $region8
    $region5: #{tpu_custom_call.1} parent=1 // loop_body
      %s15 = ssub.s32 %s10, 1
      %s16 = ssub.s32 %s10, 2
      %s26 = sadd.s32 1, %s19
      %p27 = scmp.ge.s32.totalorder %s26, 1
      %s28 = scalar_select %p27, 0, %s26
      %s29 = sadd.s32 1, %s18
      %s30 = scalar_select %p27, %s29, %s18
      %p31 = scmp.ge.s32.totalorder %s30, 1
      %s32 = scalar_select %p31, 0, %s30
      %s33 = sadd.s32 1, %s17
      %s34 = scalar_select %p31, %s33, %s17
      %p35 = scmp.ge.s32.totalorder %s34, 2
      %s36 = scalar_select %p35, 0, %s34
      %s37 = sadd.s32 %s18, %s19
      %s38 = sadd.s32 %s32, %s28
      %s39 = ssub.s32 %s17, %s36
      %s40 = ssub.s32 %s37, %s38
      %s41 = sor.u32 %s39, %s40
      %p42 = scmp.eq.s32.totalorder %s41, 0
      %s44 = sadd.s32 %s43, 1
      %s45 = scalar_select %p42, %s43, %s44
      %p48 = pneg %p42
      %p49 = scmp.eq.s32.totalorder %s10, 1
      %p50 = por %p48, %p49
      %p51 = scmp.ne.s32.totalorder %s43, %s46
      %p52 = scmp.eq.s32.totalorder %s10, 0
      %p53 = por %p51, %p52
      %p54 = scmp.ne.s32.totalorder %s43, %s46
      %p55 = scmp.eq.s32.totalorder %s15, 1
      %p56 = por %p54, %p55
      %p57 = scmp.ne.s32.totalorder %s46, %s47
      %p58 = scmp.eq.s32.totalorder %s15, 0
      %p59 = por %p57, %p58
      %p60 = scmp.ne.s32.totalorder %s46, %s47
      %p61 = scmp.eq.s32.totalorder %s16, 1
      %p62 = por %p60, %p61
      %p64 = scmp.ne.s32.totalorder %s47, %s63
      %p65 = scmp.eq.s32.totalorder %s16, 0
      %p66 = por %p64, %p65
      %s67 = ssub.s32 %s18, %s32
      %s68 = ssub.s32 %s17, %s36
      %s69 = sor.u32 %s67, %s68
      %p70 = scmp.eq.s32.totalorder %s69, 0
      %s72 = sadd.s32 %s71, 1
      %s73 = scalar_select %p70, %s71, %s72
      %p76 = pneg %p70
      %p77 = scmp.eq.s32.totalorder %s10, 1
      %p78 = por %p76, %p77
      %p79 = scmp.ne.s32.totalorder %s71, %s74
      %p80 = scmp.eq.s32.totalorder %s10, 0
      %p81 = por %p79, %p80
      %p82 = scmp.ne.s32.totalorder %s71, %s74
      %p83 = scmp.eq.s32.totalorder %s15, 1
      %p84 = por %p82, %p83
      %p85 = scmp.ne.s32.totalorder %s74, %s75
      %p86 = scmp.eq.s32.totalorder %s15, 0
      %p87 = por %p85, %p86
      %p88 = scmp.ne.s32.totalorder %s74, %s75
      %p89 = scmp.eq.s32.totalorder %s16, 1
      %p90 = por %p88, %p89
      %p92 = scmp.ne.s32.totalorder %s75, %s91
      %p93 = scmp.eq.s32.totalorder %s16, 0
      %p94 = por %p92, %p93
      %p95 = scmp.le.s32.totalorder 1, %s10
      %p96 = scmp.lt.s32.totalorder %s10, 3
      %p97 = pnand %p95, %p96
      %p98 = pneg %p97
      // Predicated region
      $region9: #{tpu_custom_call.1} parent=5 // pred_check
        _
      $region10: #{tpu_custom_call.1} parent=5 // pred_check_branch
        %100 = sbr.rel (%p97) target = $region12
      $region11: #{tpu_custom_call.1} parent=5 // pred_region
        %s101 = ssub.s32 %s10, 1
      $region12: #{tpu_custom_call.1} parent=5 // pred_fallthru
        _
      %p102 = scmp.lt.s32.totalorder %s10, 2
      // Predicated region
      $region13: #{tpu_custom_call.1} parent=5 // pred_check
        %p103 = pneg %p102
      $region14: #{tpu_custom_call.1} parent=5 // pred_check_branch
        %105 = sbr.rel (%p103) target = $region16
      $region15: #{tpu_custom_call.1} parent=5 // pred_region
        // Predicated region
        $region17: #{tpu_custom_call.1} parent=15 // pred_check
          %p106 = pneg %p53
        $region18: #{tpu_custom_call.1} parent=15 // pred_check_branch
          %108 = sbr.rel (%p106) target = $region20
        $region19: #{tpu_custom_call.1} parent=15 // pred_region
          %s109 = sand.u32 %s43, 1
          %s110 = scalar_lea.sflag [#allocation3], %s109
          %s111 = sand.u32 %s43, 1
          %s112 = smul.addr %s111, 16
          %s113 = scalar_lea.vmem [#allocation2], %s112
          %s114 = sadd.s32 %s18, %s19
          %s115 = smul.u32 2, %s114
          %s117 = ssub.s32 256, 256
          %118 = vsyncadd %s110, %s117
          %s119 = smul.addr %s17, 2
          %s120 = sadd.s32 %s115, %s119
          %s121 = smul.addr %s120, 128
          %s122 = scalar_lea.hbm %s0, %s121
          %s124 = sshll.u32 %s113, 4
          %s125 = int_to_ptr.vmem [resolvable:$true] %s124
          %127 = dma.hbm_to_vmem [thread:$0]  %s122, 256, %s125, %s110
        $region20: #{tpu_custom_call.1} parent=15 // pred_fallthru
          _
      $region16: #{tpu_custom_call.1} parent=5 // pred_fallthru
        _
      %p128 = scmp.le.s32.totalorder 1, %s10
      %p129 = scmp.lt.s32.totalorder %s10, 3
      %p130 = pnand %p128, %p129
      %p131 = pneg %p130
      // Predicated region
      $region21: #{tpu_custom_call.1} parent=5 // pred_check
        _
      $region22: #{tpu_custom_call.1} parent=5 // pred_check_branch
        %133 = sbr.rel (%p130) target = $region24
      $region23: #{tpu_custom_call.1} parent=5 // pred_region
        %s134 = ssub.s32 %s10, 1
        %s135 = sand.u32 %s46, 1
        %s136 = scalar_lea.sflag [#allocation3], %s135
        %s137 = sand.u32 %s46, 1
        %s138 = smul.addr %s137, 16
        %s139 = scalar_lea.vmem [#allocation2], %s138
        // Predicated region
        $region25: #{tpu_custom_call.1} parent=23 // pred_check
          %p140 = pneg %p59
        $region26: #{tpu_custom_call.1} parent=23 // pred_check_branch
          %142 = sbr.rel (%p140) target = $region28
        $region27: #{tpu_custom_call.1} parent=23 // pred_region
          %143 = dma.done %s136, 256
        $region28: #{tpu_custom_call.1} parent=23 // pred_fallthru
          _
        %s144 = sand.u32 %s46, 1
        %s145 = scalar_lea.sflag [#allocation3], %s144
        %s146 = sand.u32 %s46, 1
        %s147 = smul.addr %s146, 16
        %s148 = scalar_lea.vmem [#allocation2], %s147
        %p149 = pneg %p59
        %p150 = pneg %p56
        %p151 = pneg %p87
        %p152 = pneg %p84
        %p153 = scmp.lt.s32.totalorder %s21, 0
        %s154 = scalar_select %p153, %s21, 0
        %p155 = scmp.lt.s32.totalorder %s20, 1
        %s156 = scalar_select %p155, %s20, 1
        %s157 = smul.addr %s154, 2
        %s158 = sadd.s32 %s156, %s157
        %s159 = smul.addr %s158, 8
        %s160 = scalar_lea.vmem %s1, %s159
        %s161 = sadd.s32 %s21, %s22
        %s162 = smul.u32 2, %s161
        %p163 = scmp.lt.s32.totalorder %s21, 0
        %s164 = scalar_select %p163, %s21, 0
        %p165 = scmp.lt.s32.totalorder %s20, 1
        %s166 = scalar_select %p165, %s20, 1
        %s167 = smul.addr %s164, 2
        %s168 = sadd.s32 %s166, %s167
        %s169 = smul.addr %s168, 8
        %s170 = scalar_lea.vmem %s1, %s169
        %p171 = scmp.eq.s32.totalorder %s22, 0
        // Predicated region
        $region29: #{tpu_custom_call.1} parent=23 // pred_check
          %p172 = pneg %p171
        $region30: #{tpu_custom_call.1} parent=23 // pred_check_branch
          %174 = sbr.rel (%p172) target = $region32
        $region31: #{tpu_custom_call.1} parent=23 // pred_region
          %vm175 = vcmask 7168
          %176 = vst.msk [vmem:[%s170] sm:$0xff] %vm175, 0.0
        $region32: #{tpu_custom_call.1} parent=23 // pred_fallthru
          _
        %v177 = vld [vmem:[%s139] sm:$0xff]
        %v178 = vld [vmem:[%s139 + $0x8] sm:$0xff]
        %v179 = vld [vmem:[%s170] sm:$0xff]
        %v180 = vadd.f32 %v177, %v178
        %181 = vadd.xlane.f32.xlu0 %v180
        %v182 = vpop.xlane.xlu0 %181
        %v183 = vadd.f32 %v179, %v182
        %vm184 = vcmask 7168
        %185 = vst.msk [vmem:[%s170] sm:$0xff] %vm184, %v183
        %p186 = scmp.lt.s32.totalorder %s21, 0
        %s187 = scalar_select %p186, %s21, 0
        %p188 = scmp.lt.s32.totalorder %s20, 1
        %s189 = scalar_select %p188, %s20, 1
        %s190 = smul.addr %s187, 2
        %s191 = sadd.s32 %s189, %s190
        %s192 = smul.addr %s191, 8
        %s193 = scalar_lea.vmem %s1, %s192
        // Predicated region
        $region33: #{tpu_custom_call.1} parent=23 // pred_check
          %p194 = pneg %p84
        $region34: #{tpu_custom_call.1} parent=23 // pred_check_branch
          %196 = sbr.rel (%p194) target = $region36
        $region35: #{tpu_custom_call.1} parent=23 // pred_region
          _
        $region36: #{tpu_custom_call.1} parent=23 // pred_fallthru
          _
      $region24: #{tpu_custom_call.1} parent=5 // pred_fallthru
        _
      %p197 = scmp.le.s32.totalorder 2, %s10
      // Predicated region
      $region37: #{tpu_custom_call.1} parent=5 // pred_check
        %p198 = pneg %p197
      $region38: #{tpu_custom_call.1} parent=5 // pred_check_branch
        %200 = sbr.rel (%p198) target = $region40
      $region39: #{tpu_custom_call.1} parent=5 // pred_region
        %s201 = ssub.s32 %s10, 2
        // Predicated region
        $region41: #{tpu_custom_call.1} parent=39 // pred_check
          %p202 = pneg %p90
        $region42: #{tpu_custom_call.1} parent=39 // pred_check_branch
          %204 = sbr.rel (%p202) target = $region44
        $region43: #{tpu_custom_call.1} parent=39 // pred_region
          %p205 = scmp.lt.s32.totalorder %s24, 0
          %s206 = scalar_select %p205, %s24, 0
          %p207 = scmp.lt.s32.totalorder %s23, 1
          %s208 = scalar_select %p207, %s23, 1
          %s209 = smul.addr %s206, 2
          %s210 = sadd.s32 %s208, %s209
          %s211 = smul.addr %s210, 8
          %s212 = scalar_lea.vmem %s1, %s211
        $region44: #{tpu_custom_call.1} parent=39 // pred_fallthru
          _
      $region40: #{tpu_custom_call.1} parent=5 // pred_fallthru
        _
    $region6: #{tpu_custom_call.1} parent=1 // loop_footer
      %s14 = sadd.s32 1, %s10
    $region7: #{tpu_custom_call.1} parent=1 // loop_footer_branch
      %9 = sbr.rel target = $region3
    $region8: #{tpu_custom_call.1} parent=1 // loop_exit
      _
    %213 = vsyncpa [#allocation3], 1
    %s214 = scalar_lea.sflag [#allocation3], 1
    %215 = vsyncpa %s214, 1

</llo_original>
